<compile_context>
chip_gen: v5e
topology: v5e:2x2
jax: 0.10.0
libtpu: 0.0.40
codegen_flags: <defaults>
</compile_context>

<pallas_src>
import functools
import math

import numpy as np
import jax
import jax.numpy as jnp
from jax import lax
from jax.experimental import pallas as pl
from jax.experimental.pallas import tpu as pltpu

LN_EPS = 1e-12

# Numerics-affecting option (per review, v6e/v7x MXU peak is quoted for bf16):
# cast matmul operands to bf16, keep f32 accumulation / softmax / LN / epilogue.
# Default False == exact f32 reference semantics.
MATMUL_IN_BF16 = False


# ----------------------------------------------------------------- helpers ----
def _mm(a, b):
    # MXU matmul with f32 accumulation; optional bf16 operand cast.
    if MATMUL_IN_BF16:
        a = a.astype(jnp.bfloat16)
        b = b.astype(jnp.bfloat16)
    return jnp.dot(a, b, preferred_element_type=jnp.float32)


def _dot_nt(a, b):
    # a @ b.T without materializing the transpose: contract last dim of both.
    if MATMUL_IN_BF16:
        a = a.astype(jnp.bfloat16)
        b = b.astype(jnp.bfloat16)
    return lax.dot_general(a, b, (((1,), (1,)), ((), ())),
                           preferred_element_type=jnp.float32)


def _pick_tile_m(m):
    # largest row tile that divides M (>=512 rows amortizes per-step overhead,
    # small enough to stay within VMEM with single-buffered weights).
    for t in (512, 256, 128, 64, 32, 16, 8):
        if m % t == 0:
            return t
    return m


def _erf(x):
    # TODO(synk): Abramowitz-Stegun 7.1.26 rational approximation of erf
    # (|err| < 1.5e-7) — lax.erf has no guaranteed Mosaic lowering.
    a1, a2, a3, a4, a5 = (0.254829592, -0.284496736, 1.421413741,
                          -1.453152027, 1.061405429)
    p = 0.3275911
    sgn = jnp.where(x >= 0.0, 1.0, -1.0)
    z = jnp.abs(x)
    t = 1.0 / (1.0 + p * z)
    poly = ((((a5 * t + a4) * t + a3) * t + a2) * t + a1) * t
    return sgn * (1.0 - poly * jnp.exp(-z * z))


def _gelu(y):
    # erf-based GELU (matches HF BERT default activation).
    return 0.5 * y * (1.0 + _erf(y * (1.0 / math.sqrt(2.0))))


def _layernorm(h, g, b):
    # two-pass variance (matches framework LayerNorm numerics).
    mean = jnp.mean(h, axis=-1, keepdims=True)
    c = h - mean
    var = jnp.mean(c * c, axis=-1, keepdims=True)
    return c * lax.rsqrt(var + LN_EPS) * g + b


_VMEM_LIMIT_CACHE = None


def _vmem_limit():
    """Scoped-VMEM limit: well above the 16/32 MiB defaults, below physical."""
    global _VMEM_LIMIT_CACHE
    if _VMEM_LIMIT_CACHE is None:
        try:
            cap = int(pltpu.get_tpu_info().vmem_capacity_bytes)
        except Exception:
            cap = 64 * 1024 * 1024
        _VMEM_LIMIT_CACHE = min(100 * 1024 * 1024, int(cap * 0.8))
    return _VMEM_LIMIT_CACHE


_WEIGHT_MODE_CACHE = "unset"


def _weight_pipeline_mode():
    """pl.Buffered(1) for grid-constant weight blocks (halves their VMEM), or
    None if this Pallas build rejects single-buffered blocks (safe fallback)."""
    global _WEIGHT_MODE_CACHE
    if _WEIGHT_MODE_CACHE != "unset":
        return _WEIGHT_MODE_CACHE
    try:
        mode = pl.Buffered(1)

        def _probe(w_ref, o_ref):
            o_ref[...] = w_ref[...] + 1.0

        out = pl.pallas_call(
            _probe,
            out_shape=jax.ShapeDtypeStruct((8, 128), jnp.float32),
            grid=(2,),
            in_specs=[pl.BlockSpec((8, 128), lambda i: (0, 0),
                                   pipeline_mode=mode)],
            out_specs=pl.BlockSpec((8, 128), lambda i: (0, 0)),
        )(jnp.zeros((8, 128), jnp.float32))
        jax.block_until_ready(out)
        _WEIGHT_MODE_CACHE = mode
    except Exception:
        _WEIGHT_MODE_CACHE = None
    return _WEIGHT_MODE_CACHE


def _wspec(shape):
    """BlockSpec for an operand whose block is constant across the grid."""
    zeros = (0,) * len(shape)
    index_map = lambda *_: zeros
    mode = _weight_pipeline_mode()
    if mode is None:
        return pl.BlockSpec(shape, index_map)
    return pl.BlockSpec(shape, index_map, pipeline_mode=mode)


def _full_spec(shape):
    zeros = (0,) * len(shape)
    return pl.BlockSpec(shape, lambda *_: zeros)


# ----------------------------------------------------------------- kernels ----
def emb_ln_kernel(we_ref, pe_ref, te_ref, g_ref, b_ref, o_ref):
    # fused word+position+token-type embedding add + LayerNorm
    # (saves a full (B*S,H) f32 HBM write+read of the embedding temporary).
    h = we_ref[...] + pe_ref[...] + te_ref[...]
    o_ref[...] = _layernorm(h, g_ref[...], b_ref[...])


def attn_block_kernel(x_ref, wqkv_ref, bqkv_ref, wo_ref, bo_ref,
                      g_ref, b_ref, m_ref, o_ref, ctx_ref,
                      *, num_heads, head_dim):
    # one grid step = one batch element; everything stays in VMEM/vregs.
    x = x_ref[...]                                            # (S, H)
    H = num_heads * head_dim
    qkv = _mm(x, wqkv_ref[...]) + bqkv_ref[...]               # fused QKV, (S, 3H)
    mask = m_ref[0]                                           # (1, S) additive mask
    scale = 1.0 / math.sqrt(head_dim)

    # Each head's context is written into the (S, H) VMEM scratch at its column
    # offset: the output projection then is ONE (S,H)@(H,H) matmul (K=H fills
    # the MXU) and no (S,H) f32 accumulator is held in vregs across the loop.
    for h in range(num_heads):                                # static head loop
        lo = h * head_dim
        q = qkv[:, lo:lo + head_dim] * scale                  # scale folded into q
        k = qkv[:, H + lo:H + lo + head_dim]
        v = qkv[:, 2 * H + lo:2 * H + lo + head_dim]
        s = _dot_nt(q, k)                                     # (S, S), no k.T copy
        s = s + mask
        s = s - jnp.max(s, axis=-1, keepdims=True)
        p = jnp.exp(s)
        p = p / jnp.sum(p, axis=-1, keepdims=True)            # exact normalization
        ctx_ref[:, lo:lo + head_dim] = _mm(p, v)              # (S, d)

    attn = _mm(ctx_ref[...], wo_ref[...]) + bo_ref[...]       # single output proj
    o_ref[...] = _layernorm(attn + x, g_ref[...], b_ref[...])


def ffn_block_kernel(x_ref, wi_ref, bi_ref, wo_ref, bo_ref, g_ref, b_ref, o_ref):
    x = x_ref[...]
    y = _mm(x, wi_ref[...]) + bi_ref[...]
    y = _gelu(y)
    f = _mm(y, wo_ref[...]) + bo_ref[...]
    o_ref[...] = _layernorm(f + x, g_ref[...], b_ref[...])


def epilogue_kernel(*refs, num_reg, T, n_atoms, mu, scale):
    # fused regressor MLP (exact SiLU) -> theta head -> Debye Cv quadrature.
    h = refs[0][...]                                          # (B, H)
    idx = 1
    for _ in range(num_reg):
        w_ref, b_ref = refs[idx], refs[idx + 1]
        idx += 2
        y = jnp.dot(h, w_ref[...], preferred_element_type=jnp.float32) + b_ref[...]
        h = y / (1.0 + jnp.exp(-y))                           # exact SiLU
    w_out_ref, b_out_ref, xq_ref, wq_ref, out_ref = refs[idx:idx + 5]
    theta = (jnp.dot(h, w_out_ref[...], preferred_element_type=jnp.float32)
             + b_out_ref[...]) * scale + mu                   # (B, 1)
    # TODO(synk): like the PyTorch reference, no guard against theta <= 0.
    x_D = theta / T
    t = 0.5 * x_D * (xq_ref[...] + 1.0)                       # (B, n)
    e = jnp.exp(-t)                                           # stable Debye integrand:
    f = (t ** 4) * e / ((1.0 - e) ** 2)                       # t^4 e^-t/(1-e^-t)^2
    integral = jnp.sum(wq_ref[...] * f, axis=-1, keepdims=True) * (0.5 * x_D)
    out_ref[...] = 9.0 * (T / theta) ** 3 * integral * (8.314 * n_atoms)


# ------------------------------------------------------------- pallas calls ----
def emb_layernorm(we, pe, te, g, b, *, B, S, H):
    return pl.pallas_call(
        emb_ln_kernel,
        out_shape=jax.ShapeDtypeStruct((B * S, H), jnp.float32),
        grid=(B,),
        in_specs=[pl.BlockSpec((S, H), lambda bi: (bi, 0)),   # gathered word emb
                  _wspec((S, H)),                             # position emb
                  _wspec((1, H)),                             # token-type emb (type 0)
                  _wspec((1, H)), _wspec((1, H))],            # LN gamma / beta
        out_specs=pl.BlockSpec((S, H), lambda bi: (bi, 0)),
        compiler_params=pltpu.CompilerParams(
            dimension_semantics=("parallel",), vmem_limit_bytes=_vmem_limit()),
    )(we, pe, te.reshape(1, H), g.reshape(1, H), b.reshape(1, H))


def attn_block(x, wqkv, bqkv, wo, bo, g, b, addmask, *, B, S, num_heads, head_dim):
    H = num_heads * head_dim
    kernel = functools.partial(attn_block_kernel,
                               num_heads=num_heads, head_dim=head_dim)
    return pl.pallas_call(
        kernel,
        out_shape=jax.ShapeDtypeStruct((B * S, H), jnp.float32),
        grid=(B,),
        in_specs=[
            pl.BlockSpec((S, H), lambda bi: (bi, 0)),         # x rows of batch bi
            _wspec((H, 3 * H)),                               # fused QKV weight
            _wspec((1, 3 * H)),
            _wspec((H, H)),                                   # output proj weight
            _wspec((1, H)),
            _wspec((1, H)),                                   # ln1 gamma
            _wspec((1, H)),                                   # ln1 beta
            pl.BlockSpec((1, 1, S), lambda bi: (bi, 0, 0)),   # additive mask
        ],
        out_specs=pl.BlockSpec((S, H), lambda bi: (bi, 0)),
        scratch_shapes=[pltpu.VMEM((S, H), jnp.float32)],     # per-head ctx slab
        compiler_params=pltpu.CompilerParams(
            dimension_semantics=("parallel",), vmem_limit_bytes=_vmem_limit()),
    )(x, wqkv, bqkv.reshape(1, 3 * H), wo, bo.reshape(1, H),
      g.reshape(1, H), b.reshape(1, H), addmask)


def ffn_block(x, wi, bi, wo2, bo2, g, b):
    M, H = x.shape
    I = wi.shape[1]
    tm = _pick_tile_m(M)
    # NOTE(v7x): if H/I grow so single-buffered wi+wo2 plus the (tm, I) GELU
    # intermediate no longer fit in 64 MiB VMEM, add an 'arbitrary' grid axis
    # over I with partial weight blocks, or drop tm to 256.
    return pl.pallas_call(
        ffn_block_kernel,
        out_shape=jax.ShapeDtypeStruct((M, H), jnp.float32),
        grid=(M // tm,),
        in_specs=[
            pl.BlockSpec((tm, H), lambda i: (i, 0)),
            _wspec((H, I)), _wspec((1, I)),
            _wspec((I, H)), _wspec((1, H)),
            _wspec((1, H)), _wspec((1, H)),
        ],
        out_specs=pl.BlockSpec((tm, H), lambda i: (i, 0)),
        compiler_params=pltpu.CompilerParams(
            dimension_semantics=("parallel",), vmem_limit_bytes=_vmem_limit()),
    )(x, wi, bi.reshape(1, I), wo2, bo2.reshape(1, H),
      g.reshape(1, H), b.reshape(1, H))


def regressor_debye(cls, reg_layers, w_out, b_out, T, n_atoms, n, mu, scale):
    B, H = cls.shape
    x_np, w_np = np.polynomial.legendre.leggauss(n)
    xq = jnp.asarray(x_np, jnp.float32).reshape(1, n)
    wq = jnp.asarray(w_np, jnp.float32).reshape(1, n)

    args = [cls]
    in_specs = [_full_spec((B, H))]
    for reg in reg_layers:
        args += [reg["w"], reg["b"].reshape(1, H)]
        in_specs += [_full_spec((H, H)), _full_spec((1, H))]
    args += [w_out, b_out.reshape(1, 1), xq, wq]
    in_specs += [_full_spec((H, 1)), _full_spec((1, 1)),
                 _full_spec((1, n)), _full_spec((1, n))]

    out = pl.pallas_call(
        functools.partial(epilogue_kernel, num_reg=len(reg_layers),
                          T=float(T), n_atoms=float(n_atoms),
                          mu=float(mu), scale=float(scale)),
        out_shape=jax.ShapeDtypeStruct((B, 1), jnp.float32),
        grid=(1,),
        in_specs=in_specs,
        out_specs=_full_spec((B, 1)),
        compiler_params=pltpu.CompilerParams(vmem_limit_bytes=_vmem_limit()),
    )(*args)
    return out[:, 0]


# --------------------------------------------------------------- parameters ----
def init_params(key, vocab_size, max_pos, num_heads, num_hidden_layers,
                num_reg_layers):
    H = num_heads * 64
    I = H * 4
    keys = iter(jax.random.split(key, 16 + 12 * num_hidden_layers + 4 * num_reg_layers))
    nrm = lambda shape: jax.random.normal(next(keys), shape, jnp.float32) * 0.02

    p = {
        "num_heads": num_heads,
        "word_emb": nrm((vocab_size, H)),
        "pos_emb": nrm((max_pos, H)),
        "tok_emb": nrm((1, H)),
        "emb_ln_g": jnp.ones((H,), jnp.float32),
        "emb_ln_b": jnp.zeros((H,), jnp.float32),
        "layers": [],
        "reg_layers": [],
    }
    for _ in range(num_hidden_layers):
        # fused QKV weight/bias precomputed ONCE at init (per review: do not
        # re-concatenate (H,H) q/k/v weights in every forward pass).
        wqkv = jnp.concatenate([nrm((H, H)), nrm((H, H)), nrm((H, H))], axis=1)
        p["layers"].append({
            "wqkv": wqkv, "bqkv": jnp.zeros((3 * H,), jnp.float32),
            "wo": nrm((H, H)), "bo": jnp.zeros((H,), jnp.float32),
            "ln1_g": jnp.ones((H,), jnp.float32), "ln1_b": jnp.zeros((H,), jnp.float32),
            "wi": nrm((H, I)), "bi": jnp.zeros((I,), jnp.float32),
            "wo2": nrm((I, H)), "bo2": jnp.zeros((H,), jnp.float32),
            "ln2_g": jnp.ones((H,), jnp.float32), "ln2_b": jnp.zeros((H,), jnp.float32),
        })
    for _ in range(num_reg_layers):
        p["reg_layers"].append({"w": nrm((H, H)), "b": jnp.zeros((H,), jnp.float32)})
    p["reg_out_w"] = nrm((H, 1))
    p["reg_out_b"] = jnp.zeros((1,), jnp.float32)
    return p


# ----------------------------------------------------------------- forward ----
def cloud_forward(params, input_ids, attention_mask,
                  T=300.0, n_atoms=2, n=20, mu=1500.0, scale=1200.0):
    B, S = input_ids.shape
    nH = params["num_heads"]
    d = 64
    H = nH * d

    if T == 0:
        return jnp.zeros((), jnp.float32)

    # --- embeddings: gather stays in JAX glue; add + LayerNorm fused in one kernel ---
    we = params["word_emb"][input_ids].reshape(B * S, H)      # (B*S, H)
    pe = params["pos_emb"][:S]                                # (S, H)
    x = emb_layernorm(we, pe, params["tok_emb"],
                      params["emb_ln_g"], params["emb_ln_b"], B=B, S=S, H=H)

    # --- extended additive attention mask, shaped (B,1,S) for per-batch blocks ---
    am = (1.0 - attention_mask.astype(jnp.float32)) * -10000.0
    addmask = am[:, None, :]                                  # (B,1,S)

    # --- BERT encoder: 2 fused pallas_calls per layer ---
    for lyr in params["layers"]:
        x = attn_block(x, lyr["wqkv"], lyr["bqkv"], lyr["wo"], lyr["bo"],
                       lyr["ln1_g"], lyr["ln1_b"], addmask,
                       B=B, S=S, num_heads=nH, head_dim=d)
        x = ffn_block(x, lyr["wi"], lyr["bi"], lyr["wo2"], lyr["bo2"],
                      lyr["ln2_g"], lyr["ln2_b"])

    # --- fused regressor + Debye Cv epilogue on the [CLS] token ---
    cls = x.reshape(B, S, H)[:, 0, :]                         # (B,H); dropout = identity
    return regressor_debye(cls, params["reg_layers"],
                           params["reg_out_w"], params["reg_out_b"],
                           T, n_atoms, n, mu, scale)          # (B,)


# -------------------------------------------------------------------- main ----
if __name__ == "__main__":
    config = dict(num_attention_heads=2, num_hidden_layers=2, num_layers=2,
                  max_position_embeddings=16, vocab_size=32)
    B, S = 2, 8

    key = jax.random.PRNGKey(0)
    k_param, k_ids = jax.random.split(key)
    params = init_params(k_param,
                         vocab_size=config["vocab_size"],
                         max_pos=config["max_position_embeddings"],
                         num_heads=config["num_attention_heads"],
                         num_hidden_layers=config["num_hidden_layers"],
                         num_reg_layers=config["num_layers"])

    input_ids = jax.random.randint(k_ids, (B, S), 0, config["vocab_size"], jnp.int32)
    attention_mask = jnp.ones((B, S), jnp.float32).at[1, -2:].set(0.0)

    cv = cloud_forward(params, input_ids, attention_mask,
                       T=300.0, n_atoms=2, n=20, mu=1500.0, scale=1200.0)
    cv = jax.block_until_ready(cv)
    assert cv.shape == (B,) and bool(jnp.all(jnp.isfinite(cv)))
    print("KERNEL_OK")
</pallas_src>

<mosaic_0001>
module attributes {stable_mosaic.version = 11 : i64} {
  func.func @_probe(%arg0: i32, %arg1: memref<8x128xf32, #tpu.memory_space<vmem>>, %arg2: memref<8x128xf32, #tpu.memory_space<vmem>>) attributes {dimension_semantics = [#tpu.dimension_semantics<arbitrary>], iteration_bounds = array<i64: 2>, scalar_prefetch = 0 : i64, scratch_operands = 0 : i64, tpu.core_type = #tpu.core_type<tc>, window_params = [{pipeline_mode = #tpu.pipeline_mode<synchronous>, transform_indices = @transform_0, window_bounds = array<i64: 8, 128>}, {pipeline_mode = #tpu.pipeline_mode<synchronous>, transform_indices = @transform_1, window_bounds = array<i64: 8, 128>}]} {
    %c0 = arith.constant 0 : index
    %c0_0 = arith.constant 0 : index
    %0 = vector.load %arg1[%c0, %c0_0] : memref<8x128xf32, #tpu.memory_space<vmem>>, vector<8x128xf32>
    %cst = arith.constant 1.000000e+00 : f32
    %1 = vector.broadcast %cst : f32 to vector<8x128xf32>
    %2 = arith.addf %0, %1 : vector<8x128xf32>
    %c0_1 = arith.constant 0 : index
    %c0_2 = arith.constant 0 : index
    %3 = vector.load %arg2[%c0_1, %c0_2] : memref<8x128xf32, #tpu.memory_space<vmem>>, vector<8x128xf32>
    tpu.vector_store %arg2[%c0_1, %c0_2], %2 {strides = array<i32>} : memref<8x128xf32, #tpu.memory_space<vmem>>, vector<8x128xf32>,
    return
  }
  func.func @transform_0(%arg0: i32) -> (i32, i32) {
    %c0_i32 = arith.constant 0 : i32
    %c0_i32_0 = arith.constant 0 : i32
    %c0_i32_1 = arith.constant 0 : i32
    return %c0_i32, %c0_i32_0 : i32, i32
  }
  func.func @transform_1(%arg0: i32) -> (i32, i32) {
    %c0_i32 = arith.constant 0 : i32
    %c0_i32_0 = arith.constant 0 : i32
    %c0_i32_1 = arith.constant 0 : i32
    return %c0_i32, %c0_i32_0 : i32, i32
  }
}

module attributes {stable_mosaic.version = 11 : i64} {
  func.func @emb_ln_kernel(%arg0: i32, %arg1: memref<8x128xf32, #tpu.memory_space<vmem>>, %arg2: memref<8x128xf32, #tpu.memory_space<vmem>>, %arg3: memref<1x128xf32, #tpu.memory_space<vmem>>, %arg4: memref<1x128xf32, #tpu.memory_space<vmem>>, %arg5: memref<1x128xf32, #tpu.memory_space<vmem>>, %arg6: memref<8x128xf32, #tpu.memory_space<vmem>>) attributes {dimension_semantics = [#tpu.dimension_semantics<parallel>], iteration_bounds = array<i64: 2>, scalar_prefetch = 0 : i64, scratch_operands = 0 : i64, tpu.core_type = #tpu.core_type<tc>, window_params = [{transform_indices = @transform_0, window_bounds = array<i64: 8, 128>}, {pipeline_mode = #tpu.pipeline_mode<synchronous>, transform_indices = @transform_1, window_bounds = array<i64: 8, 128>}, {pipeline_mode = #tpu.pipeline_mode<synchronous>, transform_indices = @transform_2, window_bounds = array<i64: 1, 128>}, {pipeline_mode = #tpu.pipeline_mode<synchronous>, transform_indices = @transform_3, window_bounds = array<i64: 1, 128>}, {pipeline_mode = #tpu.pipeline_mode<synchronous>, transform_indices = @transform_4, window_bounds = array<i64: 1, 128>}, {transform_indices = @transform_5, window_bounds = array<i64: 8, 128>}]} {
    %c0 = arith.constant 0 : index
    %c0_0 = arith.constant 0 : index
    %0 = vector.load %arg1[%c0, %c0_0] : memref<8x128xf32, #tpu.memory_space<vmem>>, vector<8x128xf32>
    %c0_1 = arith.constant 0 : index
    %c0_2 = arith.constant 0 : index
    %1 = vector.load %arg2[%c0_1, %c0_2] : memref<8x128xf32, #tpu.memory_space<vmem>>, vector<8x128xf32>
    %2 = arith.addf %0, %1 : vector<8x128xf32>
    %c0_3 = arith.constant 0 : index
    %c0_4 = arith.constant 0 : index
    %3 = vector.load %arg3[%c0_3, %c0_4] : memref<1x128xf32, #tpu.memory_space<vmem>>, vector<1x128xf32>
    %4 = vector.broadcast %3 : vector<1x128xf32> to vector<8x128xf32>
    %5 = arith.addf %2, %4 : vector<8x128xf32>
    %c0_5 = arith.constant 0 : index
    %c0_6 = arith.constant 0 : index
    %6 = vector.load %arg4[%c0_5, %c0_6] : memref<1x128xf32, #tpu.memory_space<vmem>>, vector<1x128xf32>
    %c0_7 = arith.constant 0 : index
    %c0_8 = arith.constant 0 : index
    %7 = vector.load %arg5[%c0_7, %c0_8] : memref<1x128xf32, #tpu.memory_space<vmem>>, vector<1x128xf32>
    %cst = arith.constant dense<0.000000e+00> : vector<8xf32>
    %8 = vector.multi_reduction <add>, %5, %cst [1] : vector<8x128xf32> to vector<8xf32>
    %9 = vector.shape_cast %8 : vector<8xf32> to vector<8x1xf32>
    %cst_9 = arith.constant 1.280000e+02 : f32
    %10 = vector.broadcast %cst_9 : f32 to vector<8x1xf32>
    %11 = arith.divf %9, %10 : vector<8x1xf32>
    %12 = vector.broadcast %11 : vector<8x1xf32> to vector<8x128xf32>
    %13 = arith.subf %5, %12 : vector<8x128xf32>
    %14 = arith.mulf %13, %13 : vector<8x128xf32>
    %cst_10 = arith.constant dense<0.000000e+00> : vector<8xf32>
    %15 = vector.multi_reduction <add>, %14, %cst_10 [1] : vector<8x128xf32> to vector<8xf32>
    %16 = vector.shape_cast %15 : vector<8xf32> to vector<8x1xf32>
    %cst_11 = arith.constant 1.280000e+02 : f32
    %17 = vector.broadcast %cst_11 : f32 to vector<8x1xf32>
    %18 = arith.divf %16, %17 : vector<8x1xf32>
    %cst_12 = arith.constant 9.99999996E-13 : f32
    %19 = vector.broadcast %cst_12 : f32 to vector<8x1xf32>
    %20 = arith.addf %18, %19 : vector<8x1xf32>
    %21 = math.rsqrt %20 : vector<8x1xf32>
    %22 = vector.broadcast %21 : vector<8x1xf32> to vector<8x128xf32>
    %23 = arith.mulf %13, %22 : vector<8x128xf32>
    %24 = vector.broadcast %6 : vector<1x128xf32> to vector<8x128xf32>
    %25 = arith.mulf %23, %24 : vector<8x128xf32>
    %26 = vector.broadcast %7 : vector<1x128xf32> to vector<8x128xf32>
    %27 = arith.addf %25, %26 : vector<8x128xf32>
    %c0_13 = arith.constant 0 : index
    %c0_14 = arith.constant 0 : index
    %28 = vector.load %arg6[%c0_13, %c0_14] : memref<8x128xf32, #tpu.memory_space<vmem>>, vector<8x128xf32>
    tpu.vector_store %arg6[%c0_13, %c0_14], %27 {strides = array<i32>} : memref<8x128xf32, #tpu.memory_space<vmem>>, vector<8x128xf32>,
    return
  }
  func.func @transform_0(%arg0: i32) -> (i32, i32) {
    %c0_i32 = arith.constant 0 : i32
    %c0_i32_0 = arith.constant 0 : i32
    return %arg0, %c0_i32 : i32, i32
  }
  func.func @transform_1(%arg0: i32) -> (i32, i32) {
    %c0_i32 = arith.constant 0 : i32
    %c0_i32_0 = arith.constant 0 : i32
    %c0_i32_1 = arith.constant 0 : i32
    return %c0_i32, %c0_i32_0 : i32, i32
  }
  func.func @transform_2(%arg0: i32) -> (i32, i32) {
    %c0_i32 = arith.constant 0 : i32
    %c0_i32_0 = arith.constant 0 : i32
    %c0_i32_1 = arith.constant 0 : i32
    return %c0_i32, %c0_i32_0 : i32, i32
  }
  func.func @transform_3(%arg0: i32) -> (i32, i32) {
    %c0_i32 = arith.constant 0 : i32
    %c0_i32_0 = arith.constant 0 : i32
    %c0_i32_1 = arith.constant 0 : i32
    return %c0_i32, %c0_i32_0 : i32, i32
  }
  func.func @transform_4(%arg0: i32) -> (i32, i32) {
    %c0_i32 = arith.constant 0 : i32
    %c0_i32_0 = arith.constant 0 : i32
    %c0_i32_1 = arith.constant 0 : i32
    return %c0_i32, %c0_i32_0 : i32, i32
  }
  func.func @transform_5(%arg0: i32) -> (i32, i32) {
    %c0_i32 = arith.constant 0 : i32
    %c0_i32_0 = arith.constant 0 : i32
    return %arg0, %c0_i32 : i32, i32
  }
}

</mosaic_0001>

<llo_original>
// kernel: tpu_custom_call.1
$region0: #{tpu_custom_call.1}
  #allocation0 [shape = 'u32[]', space=smem, size = 0x4, offset = 0x4, fixed_abs, tag = 'smem constant byte address 0x4 - core index']
  #allocation1 [shape = 'u32[72,128]{1,0:T(1,128)}', space=vmem, size = 0x9000, scoped, tag = 'internal scratch']
  %s0 = inlined_call_operand.hbm [shape: f32[8,128], index: 0, kind: input, shape index: {}]
  %s1 = inlined_call_operand.hbm [shape: f32[8,128], index: 1, kind: output, shape index: {}]
  %s2 = sld [smem:[#allocation0]]
  $region41: #{tpu_custom_call.1} parent=0
    _
  %s4 = ssub.s32 1, %s2
  %s5 = scalar_select 0, %s4, %s2
  $region1: #{tpu_custom_call.1} parent=0
    #allocation2 [shape = 'u8[4096]{0}', space=vmem, size = 0x1000, scoped, tag = 'input window, operand 0, single buffered']
    #allocation3 [shape = 's32[2]{0}', space=sflag, size = 0x8, scoped, tag = 'scoped memory for tpu_custom_call.1']
    #allocation4 [shape = 's32[2]{0}', space=sflag, size = 0x8, scoped, tag = 'scoped memory for tpu_custom_call.1']
    #allocation5 [shape = 'u8[4096]{0}', space=vmem, size = 0x1000, scoped, tag = 'output window, operand 0, single buffered']
    %6 = vsyncpa [#allocation3], 0
    %7 = vsyncpa [#allocation4], 0
    loop: start=0, step=1, limit=4
    $region2: #{tpu_custom_call.1} parent=1 // loop_pre_header
      _
    $region3: #{tpu_custom_call.1} parent=1 // loop_header
      %s9 = sphi 0, %s13
      %p10 = scmp.ge.s32.totalorder %s9, 4
      %s17 = sphi 0, %s17
      %s19 = sphi 0, %s17
      %s20 = sphi 0, %s19
      %s34 = sphi 0, %s20
      %s38 = sphi 0, %s38
      %s40 = sphi 0, %s38
      %s41 = sphi 0, %s40
      %s55 = sphi 0, %s41
    $region4: #{tpu_custom_call.1} parent=1 // loop_header_branch
      %12 = sbr.rel (%p10) target = $region8
    $region5: #{tpu_custom_call.1} parent=1 // loop_body
      %s14 = ssub.s32 %s9, 1
      %s15 = ssub.s32 %s9, 2
      %s16 = sadd.s32 %s9, 1
      %s18 = sadd.s32 %s17, 1
      %p21 = scmp.eq.s32.totalorder %s9, 1
      %p22 = scmp.ne.s32.totalorder %s17, %s19
      %p23 = scmp.eq.s32.totalorder %s9, 0
      %p24 = por %p22, %p23
      %p25 = scmp.ne.s32.totalorder %s17, %s19
      %p26 = scmp.eq.s32.totalorder %s14, 1
      %p27 = por %p25, %p26
      %p28 = scmp.ne.s32.totalorder %s19, %s20
      %p29 = scmp.eq.s32.totalorder %s14, 0
      %p30 = por %p28, %p29
      %p31 = scmp.ne.s32.totalorder %s19, %s20
      %p32 = scmp.eq.s32.totalorder %s15, 1
      %p33 = por %p31, %p32
      %p35 = scmp.ne.s32.totalorder %s20, %s34
      %p36 = scmp.eq.s32.totalorder %s15, 0
      %p37 = por %p35, %p36
      %s39 = sadd.s32 %s38, 1
      %p42 = scmp.eq.s32.totalorder %s9, 1
      %p43 = scmp.ne.s32.totalorder %s38, %s40
      %p44 = scmp.eq.s32.totalorder %s9, 0
      %p45 = por %p43, %p44
      %p46 = scmp.ne.s32.totalorder %s38, %s40
      %p47 = scmp.eq.s32.totalorder %s14, 1
      %p48 = por %p46, %p47
      %p49 = scmp.ne.s32.totalorder %s40, %s41
      %p50 = scmp.eq.s32.totalorder %s14, 0
      %p51 = por %p49, %p50
      %p52 = scmp.ne.s32.totalorder %s40, %s41
      %p53 = scmp.eq.s32.totalorder %s15, 1
      %p54 = por %p52, %p53
      %p56 = scmp.ne.s32.totalorder %s41, %s55
      %p57 = scmp.eq.s32.totalorder %s15, 0
      %p58 = por %p56, %p57
      %p59 = scmp.le.s32.totalorder 1, %s9
      %p60 = scmp.lt.s32.totalorder %s9, 3
      %p61 = pnand %p59, %p60
      %p62 = pneg %p61
      // Predicated region
      $region9: #{tpu_custom_call.1} parent=5 // pred_check
        _
      $region10: #{tpu_custom_call.1} parent=5 // pred_check_branch
        %64 = sbr.rel (%p61) target = $region12
      $region11: #{tpu_custom_call.1} parent=5 // pred_region
        %s65 = ssub.s32 %s9, 1
        // Predicated region
        $region13: #{tpu_custom_call.1} parent=11 // pred_check
          %p66 = pneg %p30
        $region14: #{tpu_custom_call.1} parent=11 // pred_check_branch
          %68 = sbr.rel (%p66) target = $region16
        $region15: #{tpu_custom_call.1} parent=11 // pred_region
          %70 = vsyncadd [#allocation3], 0
          %s72 = sshll.u32 %s0, 4
          %s73 = int_to_ptr.hbm [resolvable:$true] %s72
          %s74 = sshll.u32 [#allocation2], 4
          %s75 = int_to_ptr.vmem [resolvable:$true] %s74
          %77 = dma.hbm_to_vmem [thread:$0]  %s73, 128, %s75, [#allocation3]
        $region16: #{tpu_custom_call.1} parent=11 // pred_fallthru
          _
      $region12: #{tpu_custom_call.1} parent=5 // pred_fallthru
        _
      %p78 = scmp.lt.s32.totalorder %s9, 2
      // Predicated region
      $region17: #{tpu_custom_call.1} parent=5 // pred_check
        %p79 = pneg %p78
      $region18: #{tpu_custom_call.1} parent=5 // pred_check_branch
        %81 = sbr.rel (%p79) target = $region20
      $region19: #{tpu_custom_call.1} parent=5 // pred_region
        _
      $region20: #{tpu_custom_call.1} parent=5 // pred_fallthru
        _
      %p82 = scmp.le.s32.totalorder 1, %s9
      %p83 = scmp.lt.s32.totalorder %s9, 3
      %p84 = pnand %p82, %p83
      %p85 = pneg %p84
      // Predicated region
      $region21: #{tpu_custom_call.1} parent=5 // pred_check
        _
      $region22: #{tpu_custom_call.1} parent=5 // pred_check_branch
        %87 = sbr.rel (%p84) target = $region24
      $region23: #{tpu_custom_call.1} parent=5 // pred_region
        %s88 = ssub.s32 %s9, 1
        // Predicated region
        $region25: #{tpu_custom_call.1} parent=23 // pred_check
          %p89 = pneg %p30
        $region26: #{tpu_custom_call.1} parent=23 // pred_check_branch
          %91 = sbr.rel (%p89) target = $region28
        $region27: #{tpu_custom_call.1} parent=23 // pred_region
          %93 = dma.done [#allocation3], 128
        $region28: #{tpu_custom_call.1} parent=23 // pred_fallthru
          _
        %p94 = pneg %p30
        %p95 = pneg %p27
        %p96 = pneg %p51
        %p97 = pneg %p48
        %v98 = vld [vmem:[#allocation2] sm:$0xff]
        %v99 = vadd.f32 %v98, 1.0
        %100 = vst [vmem:[#allocation5] sm:$0xff] %v99
        // Predicated region
        $region29: #{tpu_custom_call.1} parent=23 // pred_check
          %p101 = pneg %p48
        $region30: #{tpu_custom_call.1} parent=23 // pred_check_branch
          %103 = sbr.rel (%p101) target = $region32
        $region31: #{tpu_custom_call.1} parent=23 // pred_region
          %105 = vsyncadd [#allocation4], 0
          %s107 = sshll.u32 [#allocation5], 4
          %s108 = int_to_ptr.vmem [resolvable:$true] %s107
          %s109 = sshll.u32 %s1, 4
          %s110 = int_to_ptr.hbm [resolvable:$true] %s109
          %112 = dma.vmem_to_hbm [thread:$0]  %s108, 128, %s110, [#allocation4]
        $region32: #{tpu_custom_call.1} parent=23 // pred_fallthru
          _
        // Predicated region
        $region33: #{tpu_custom_call.1} parent=23 // pred_check
          %p113 = pneg %p48
        $region34: #{tpu_custom_call.1} parent=23 // pred_check_branch
          %115 = sbr.rel (%p113) target = $region36
        $region35: #{tpu_custom_call.1} parent=23 // pred_region
          %117 = dma.done [#allocation4], 128
        $region36: #{tpu_custom_call.1} parent=23 // pred_fallthru
          _
      $region24: #{tpu_custom_call.1} parent=5 // pred_fallthru
        _
      %p118 = scmp.le.s32.totalorder 2, %s9
      // Predicated region
      $region37: #{tpu_custom_call.1} parent=5 // pred_check
        %p119 = pneg %p118
      $region38: #{tpu_custom_call.1} parent=5 // pred_check_branch
        %121 = sbr.rel (%p119) target = $region40
      $region39: #{tpu_custom_call.1} parent=5 // pred_region
        %s122 = ssub.s32 %s9, 2
      $region40: #{tpu_custom_call.1} parent=5 // pred_fallthru
        _
    $region6: #{tpu_custom_call.1} parent=1 // loop_footer
      %s13 = sadd.s32 1, %s9
    $region7: #{tpu_custom_call.1} parent=1 // loop_footer_branch
      %8 = sbr.rel target = $region3
    $region8: #{tpu_custom_call.1} parent=1 // loop_exit
      _
    %123 = vsyncpa [#allocation3], 1
    %s124 = scalar_lea.sflag [#allocation3], 1
    %125 = vsyncpa %s124, 1
    %126 = vsyncpa [#allocation4], 1
    %s127 = scalar_lea.sflag [#allocation4], 1
    %128 = vsyncpa %s127, 1

// kernel: tpu_custom_call.1
$region0: #{tpu_custom_call.1}
  #allocation0 [shape = 'u32[]', space=smem, size = 0x4, offset = 0x4, fixed_abs, tag = 'smem constant byte address 0x4 - core index']
  #allocation1 [shape = 'u32[72,128]{1,0:T(1,128)}', space=vmem, size = 0x9000, scoped, tag = 'internal scratch']
  %s0 = inlined_call_operand.hbm [shape: f32[16,128], index: 0, kind: input, shape index: {}]
  %s1 = inlined_call_operand.hbm [shape: f32[8,128], index: 1, kind: input, shape index: {}]
  %s2 = inlined_call_operand.vmem [shape: f32[1,128], index: 2, kind: input, shape index: {}]
  %s3 = inlined_call_operand.vmem [shape: f32[1,128], index: 3, kind: input, shape index: {}]
  %s4 = inlined_call_operand.vmem [shape: f32[1,128], index: 4, kind: input, shape index: {}]
  %s5 = inlined_call_operand.hbm [shape: f32[16,128], index: 5, kind: output, shape index: {}]
  %s6 = sld [smem:[#allocation0]]
  $region61: #{tpu_custom_call.1} parent=0
    _
  %s8 = ssub.s32 1, %s6
  %s9 = scalar_select 0, %s8, %s6
  $region1: #{tpu_custom_call.1} parent=0
    #allocation2 [shape = 'u8[8192]{0}', space=vmem, size = 0x2000, scoped, tag = 'input window, operand 0']
    #allocation3 [shape = 's32[2]{0}', space=sflag, size = 0x8, scoped, tag = 'scoped memory for tpu_custom_call.1']
    #allocation4 [shape = 's32[2]{0}', space=sflag, size = 0x8, scoped, tag = 'scoped memory for tpu_custom_call.1']
    #allocation5 [shape = 'u8[4096]{0}', space=vmem, size = 0x1000, scoped, tag = 'input window, operand 1, single buffered']
    #allocation6 [shape = 's32[1]{0}', space=sflag, size = 0x4, scoped, tag = 'scoped memory for tpu_custom_call.1']
    #allocation7 [shape = 'u8[8192]{0}', space=vmem, size = 0x2000, scoped, tag = 'output window, operand 0']
    %10 = vsyncpa [#allocation3], 0
    %s11 = scalar_lea.sflag [#allocation3], 1
    %12 = vsyncpa %s11, 0
    %13 = vsyncpa [#allocation6], 0
    %14 = vsyncpa [#allocation4], 0
    %s15 = scalar_lea.sflag [#allocation4], 1
    %16 = vsyncpa %s15, 0
    loop: start=0, step=1, limit=4
    $region2: #{tpu_custom_call.1} parent=1 // loop_pre_header
      _
    $region3: #{tpu_custom_call.1} parent=1 // loop_header
      %s18 = sphi 0, %s22
      %p19 = scmp.ge.s32.totalorder %s18, 4
      %s28 = sphi 0, %s30
      %s31 = sphi 0, %s28
      %s32 = sphi 0, %s31
      %s48 = sphi 0, %s32
      %s52 = sphi 0, %s52
      %s54 = sphi 0, %s52
      %s55 = sphi 0, %s54
      %s69 = sphi 0, %s55
      %s73 = sphi 0, %s73
      %s75 = sphi 0, %s73
      %s76 = sphi 0, %s75
      %s90 = sphi 0, %s76
      %s94 = sphi 0, %s94
      %s96 = sphi 0, %s94
      %s97 = sphi 0, %s96
      %s111 = sphi 0, %s97
      %s115 = sphi 0, %s115
      %s117 = sphi 0, %s115
      %s118 = sphi 0, %s117
      %s132 = sphi 0, %s118
      %s138 = sphi 0, %s140
      %s141 = sphi 0, %s138
      %s142 = sphi 0, %s141
      %s158 = sphi 0, %s142
    $region4: #{tpu_custom_call.1} parent=1 // loop_header_branch
      %21 = sbr.rel (%p19) target = $region8
    $region5: #{tpu_custom_call.1} parent=1 // loop_body
      %s23 = ssub.s32 %s18, 1
      %s24 = ssub.s32 %s18, 2
      %s25 = sadd.s32 %s18, 1
      %s26 = ssub.s32 %s18, %s25
      %p27 = scmp.eq.s32.totalorder %s26, 0
      %s29 = sadd.s32 %s28, 1
      %s30 = scalar_select %p27, %s28, %s29
      %p33 = pneg %p27
      %p34 = scmp.eq.s32.totalorder %s18, 1
      %p35 = por %p33, %p34
      %p36 = scmp.ne.s32.totalorder %s28, %s31
      %p37 = scmp.eq.s32.totalorder %s18, 0
      %p38 = por %p36, %p37
      %p39 = scmp.ne.s32.totalorder %s28, %s31
      %p40 = scmp.eq.s32.totalorder %s23, 1
      %p41 = por %p39, %p40
      %p42 = scmp.ne.s32.totalorder %s31, %s32
      %p43 = scmp.eq.s32.totalorder %s23, 0
      %p44 = por %p42, %p43
      %p45 = scmp.ne.s32.totalorder %s31, %s32
      %p46 = scmp.eq.s32.totalorder %s24, 1
      %p47 = por %p45, %p46
      %p49 = scmp.ne.s32.totalorder %s32, %s48
      %p50 = scmp.eq.s32.totalorder %s24, 0
      %p51 = por %p49, %p50
      %s53 = sadd.s32 %s52, 1
      %p56 = scmp.eq.s32.totalorder %s18, 1
      %p57 = scmp.ne.s32.totalorder %s52, %s54
      %p58 = scmp.eq.s32.totalorder %s18, 0
      %p59 = por %p57, %p58
      %p60 = scmp.ne.s32.totalorder %s52, %s54
      %p61 = scmp.eq.s32.totalorder %s23, 1
      %p62 = por %p60, %p61
      %p63 = scmp.ne.s32.totalorder %s54, %s55
      %p64 = scmp.eq.s32.totalorder %s23, 0
      %p65 = por %p63, %p64
      %p66 = scmp.ne.s32.totalorder %s54, %s55
      %p67 = scmp.eq.s32.totalorder %s24, 1
      %p68 = por %p66, %p67
      %p70 = scmp.ne.s32.totalorder %s55, %s69
      %p71 = scmp.eq.s32.totalorder %s24, 0
      %p72 = por %p70, %p71
      %s74 = sadd.s32 %s73, 1
      %p77 = scmp.eq.s32.totalorder %s18, 1
      %p78 = scmp.ne.s32.totalorder %s73, %s75
      %p79 = scmp.eq.s32.totalorder %s18, 0
      %p80 = por %p78, %p79
      %p81 = scmp.ne.s32.totalorder %s73, %s75
      %p82 = scmp.eq.s32.totalorder %s23, 1
      %p83 = por %p81, %p82
      %p84 = scmp.ne.s32.totalorder %s75, %s76
      %p85 = scmp.eq.s32.totalorder %s23, 0
      %p86 = por %p84, %p85
      %p87 = scmp.ne.s32.totalorder %s75, %s76
      %p88 = scmp.eq.s32.totalorder %s24, 1
      %p89 = por %p87, %p88
      %p91 = scmp.ne.s32.totalorder %s76, %s90
      %p92 = scmp.eq.s32.totalorder %s24, 0
      %p93 = por %p91, %p92
      %s95 = sadd.s32 %s94, 1
      %p98 = scmp.eq.s32.totalorder %s18, 1
      %p99 = scmp.ne.s32.totalorder %s94, %s96
      %p100 = scmp.eq.s32.totalorder %s18, 0
      %p101 = por %p99, %p100
      %p102 = scmp.ne.s32.totalorder %s94, %s96
      %p103 = scmp.eq.s32.totalorder %s23, 1
      %p104 = por %p102, %p103
      %p105 = scmp.ne.s32.totalorder %s96, %s97
      %p106 = scmp.eq.s32.totalorder %s23, 0
      %p107 = por %p105, %p106
      %p108 = scmp.ne.s32.totalorder %s96, %s97
      %p109 = scmp.eq.s32.totalorder %s24, 1
      %p110 = por %p108, %p109
      %p112 = scmp.ne.s32.totalorder %s97, %s111
      %p113 = scmp.eq.s32.totalorder %s24, 0
      %p114 = por %p112, %p113
      %s116 = sadd.s32 %s115, 1
      %p119 = scmp.eq.s32.totalorder %s18, 1
      %p120 = scmp.ne.s32.totalorder %s115, %s117
      %p121 = scmp.eq.s32.totalorder %s18, 0
      %p122 = por %p120, %p121
      %p123 = scmp.ne.s32.totalorder %s115, %s117
      %p124 = scmp.eq.s32.totalorder %s23, 1
      %p125 = por %p123, %p124
      %p126 = scmp.ne.s32.totalorder %s117, %s118
      %p127 = scmp.eq.s32.totalorder %s23, 0
      %p128 = por %p126, %p127
      %p129 = scmp.ne.s32.totalorder %s117, %s118
      %p130 = scmp.eq.s32.totalorder %s24, 1
      %p131 = por %p129, %p130
      %p133 = scmp.ne.s32.totalorder %s118, %s132
      %p134 = scmp.eq.s32.totalorder %s24, 0
      %p135 = por %p133, %p134
      %s136 = ssub.s32 %s18, %s25
      %p137 = scmp.eq.s32.totalorder %s136, 0
      %s139 = sadd.s32 %s138, 1
      %s140 = scalar_select %p137, %s138, %s139
      %p143 = pneg %p137
      %p144 = scmp.eq.s32.totalorder %s18, 1
      %p145 = por %p143, %p144
      %p146 = scmp.ne.s32.totalorder %s138, %s141
      %p147 = scmp.eq.s32.totalorder %s18, 0
      %p148 = por %p146, %p147
      %p149 = scmp.ne.s32.totalorder %s138, %s141
      %p150 = scmp.eq.s32.totalorder %s23, 1
      %p151 = por %p149, %p150
      %p152 = scmp.ne.s32.totalorder %s141, %s142
      %p153 = scmp.eq.s32.totalorder %s23, 0
      %p154 = por %p152, %p153
      %p155 = scmp.ne.s32.totalorder %s141, %s142
      %p156 = scmp.eq.s32.totalorder %s24, 1
      %p157 = por %p155, %p156
      %p159 = scmp.ne.s32.totalorder %s142, %s158
      %p160 = scmp.eq.s32.totalorder %s24, 0
      %p161 = por %p159, %p160
      %p162 = scmp.le.s32.totalorder 1, %s18
      %p163 = scmp.lt.s32.totalorder %s18, 3
      %p164 = pnand %p162, %p163
      %p165 = pneg %p164
      // Predicated region
      $region9: #{tpu_custom_call.1} parent=5 // pred_check
        _
      $region10: #{tpu_custom_call.1} parent=5 // pred_check_branch
        %167 = sbr.rel (%p164) target = $region12
      $region11: #{tpu_custom_call.1} parent=5 // pred_region
        %s168 = ssub.s32 %s18, 1
        // Predicated region
        $region13: #{tpu_custom_call.1} parent=11 // pred_check
          %p169 = pneg %p65
        $region14: #{tpu_custom_call.1} parent=11 // pred_check_branch
          %171 = sbr.rel (%p169) target = $region16
        $region15: #{tpu_custom_call.1} parent=11 // pred_region
          %173 = vsyncadd [#allocation6], 0
          %s175 = sshll.u32 %s1, 4
          %s176 = int_to_ptr.hbm [resolvable:$true] %s175
          %s177 = sshll.u32 [#allocation5], 4
          %s178 = int_to_ptr.vmem [resolvable:$true] %s177
          %180 = dma.hbm_to_vmem [thread:$0]  %s176, 128, %s178, [#allocation6]
        $region16: #{tpu_custom_call.1} parent=11 // pred_fallthru
          _
        // Predicated region
        $region17: #{tpu_custom_call.1} parent=11 // pred_check
          %p181 = pneg %p86
        $region18: #{tpu_custom_call.1} parent=11 // pred_check_branch
          %183 = sbr.rel (%p181) target = $region20
        $region19: #{tpu_custom_call.1} parent=11 // pred_region
          _
        $region20: #{tpu_custom_call.1} parent=11 // pred_fallthru
          _
        // Predicated region
        $region21: #{tpu_custom_call.1} parent=11 // pred_check
          %p184 = pneg %p107
        $region22: #{tpu_custom_call.1} parent=11 // pred_check_branch
          %186 = sbr.rel (%p184) target = $region24
        $region23: #{tpu_custom_call.1} parent=11 // pred_region
          _
        $region24: #{tpu_custom_call.1} parent=11 // pred_fallthru
          _
        // Predicated region
        $region25: #{tpu_custom_call.1} parent=11 // pred_check
          %p187 = pneg %p128
        $region26: #{tpu_custom_call.1} parent=11 // pred_check_branch
          %189 = sbr.rel (%p187) target = $region28
        $region27: #{tpu_custom_call.1} parent=11 // pred_region
          _
        $region28: #{tpu_custom_call.1} parent=11 // pred_fallthru
          _
      $region12: #{tpu_custom_call.1} parent=5 // pred_fallthru
        _
      %p190 = scmp.lt.s32.totalorder %s18, 2
      // Predicated region
      $region29: #{tpu_custom_call.1} parent=5 // pred_check
        %p191 = pneg %p190
      $region30: #{tpu_custom_call.1} parent=5 // pred_check_branch
        %193 = sbr.rel (%p191) target = $region32
      $region31: #{tpu_custom_call.1} parent=5 // pred_region
        // Predicated region
        $region33: #{tpu_custom_call.1} parent=31 // pred_check
          %p194 = pneg %p38
        $region34: #{tpu_custom_call.1} parent=31 // pred_check_branch
          %196 = sbr.rel (%p194) target = $region36
        $region35: #{tpu_custom_call.1} parent=31 // pred_region
          %s197 = sand.u32 %s28, 1
          %s198 = scalar_lea.sflag [#allocation3], %s197
          %s199 = sand.u32 %s28, 1
          %s200 = smul.addr %s199, 8
          %s201 = scalar_lea.vmem [#allocation2], %s200
          %203 = vsyncadd %s198, 0
          %s204 = smul.addr %s18, 8
          %s205 = scalar_lea.hbm %s0, %s204
          %s207 = sshll.u32 %s205, 4
          %s208 = int_to_ptr.hbm [resolvable:$true] %s207
          %s209 = sshll.u32 %s201, 4
          %s210 = int_to_ptr.vmem [resolvable:$true] %s209
          %212 = dma.hbm_to_vmem [thread:$0]  %s208, 128, %s210, %s198
        $region36: #{tpu_custom_call.1} parent=31 // pred_fallthru
          _
      $region32: #{tpu_custom_call.1} parent=5 // pred_fallthru
        _
      %p213 = scmp.le.s32.totalorder 1, %s18
      %p214 = scmp.lt.s32.totalorder %s18, 3
      %p215 = pnand %p213, %p214
      %p216 = pneg %p215
      // Predicated region
      $region37: #{tpu_custom_call.1} parent=5 // pred_check
        _
      $region38: #{tpu_custom_call.1} parent=5 // pred_check_branch
        %218 = sbr.rel (%p215) target = $region40
      $region39: #{tpu_custom_call.1} parent=5 // pred_region
        %s219 = ssub.s32 %s18, 1
        %s220 = sand.u32 %s31, 1
        %s221 = scalar_lea.sflag [#allocation3], %s220
        %s222 = sand.u32 %s31, 1
        %s223 = smul.addr %s222, 8
        %s224 = scalar_lea.vmem [#allocation2], %s223
        // Predicated region
        $region41: #{tpu_custom_call.1} parent=39 // pred_check
          %p225 = pneg %p44
        $region42: #{tpu_custom_call.1} parent=39 // pred_check_branch
          %227 = sbr.rel (%p225) target = $region44
        $region43: #{tpu_custom_call.1} parent=39 // pred_region
          %229 = dma.done %s221, 128
        $region44: #{tpu_custom_call.1} parent=39 // pred_fallthru
          _
        // Predicated region
        $region45: #{tpu_custom_call.1} parent=39 // pred_check
          %p230 = pneg %p65
        $region46: #{tpu_custom_call.1} parent=39 // pred_check_branch
          %232 = sbr.rel (%p230) target = $region48
        $region47: #{tpu_custom_call.1} parent=39 // pred_region
          %234 = dma.done [#allocation6], 128
        $region48: #{tpu_custom_call.1} parent=39 // pred_fallthru
          _
        %s235 = sand.u32 %s31, 1
        %s236 = scalar_lea.sflag [#allocation3], %s235
        %s237 = sand.u32 %s31, 1
        %s238 = smul.addr %s237, 8
        %s239 = scalar_lea.vmem [#allocation2], %s238
        %p240 = pneg %p44
        %p241 = pneg %p41
        %p242 = pneg %p65
        %p243 = pneg %p62
        %p244 = pneg %p86
        %p245 = pneg %p83
        %p246 = pneg %p107
        %p247 = pneg %p104
        %p248 = pneg %p128
        %p249 = pneg %p125
        %p250 = pneg %p154
        %p251 = pneg %p151
        %s252 = sand.u32 %s141, 1
        %s253 = scalar_lea.sflag [#allocation4], %s252
        %s254 = sand.u32 %s141, 1
        %s255 = smul.addr %s254, 8
        %s256 = scalar_lea.vmem [#allocation7], %s255
        %v257 = vld [vmem:[%s224] sm:$0xff]
        %v258 = vld [vmem:[#allocation5] sm:$0xff]
        %v259 = vadd.f32 %v257, %v258
        %v260 = vld [vmem:[%s2] sm:$0x1]
        %v262 = vperm.slane %v260, 0
        %v264 = vadd.f32 %v259, %v262
        %v265 = vld [vmem:[%s3] sm:$0x1]
        %v266 = vld [vmem:[%s4] sm:$0x1]
        %267 = vadd.xlane.f32.xlu0 %v264
        %v268 = vpop.xlane.xlu0 %267
        %v269 = vrcp.pop 128.0
        %v270 = vmul.f32 128.0, %v269
        %v271 = vsub.f32 1.0, %v270
        %v272 = vmul.f32 %v269, %v271
        %v273 = vadd.f32 %v269, %v272
        %vm274 = vweird.f32 %v269
        %v275 = vsel %vm274, %v269, %v273
        %v276 = vmul.f32 %v268, %v275
        %v277 = vsub.f32 %v264, %v276
        %v278 = vmul.f32 %v277, %v277
        %279 = vadd.xlane.f32.xlu0 %v278
        %v280 = vpop.xlane.xlu0 %279
        %v281 = vmul.f32 %v280, %v275
        %v282 = vadd.f32 %v281, 1e-12
        %v283 = vrsqrt.pop %v282
        %v284 = vmul.f32 %v283, %v282
        %v285 = vmul.f32 %v284, %v283
        %v286 = vmul.f32 0.5, %v285
        %v287 = vsub.f32 1.5, %v286
        %v288 = vmul.f32 %v283, %v287
        %vm289 = vweird.f32 %v282
        %vm290 = vweird.f32 %v283
        %vm291 = vmor %vm289, %vm290
        %v292 = vsel %vm291, %v283, %v288
        %v293 = vmul.f32 %v277, %v292
        %v295 = vperm.slane %v265, 0
        %v297 = vmul.f32 %v293, %v295
        %v299 = vperm.slane %v266, 0
        %v301 = vadd.f32 %v297, %v299
        %302 = vst [vmem:[%s256] sm:$0xff] %v301
        %s303 = sand.u32 %s141, 1
        %s304 = scalar_lea.sflag [#allocation4], %s303
        %s305 = sand.u32 %s141, 1
        %s306 = smul.addr %s305, 8
        %s307 = scalar_lea.vmem [#allocation7], %s306
        // Predicated region
        $region49: #{tpu_custom_call.1} parent=39 // pred_check
          %p308 = pneg %p151
        $region50: #{tpu_custom_call.1} parent=39 // pred_check_branch
          %310 = sbr.rel (%p308) target = $region52
        $region51: #{tpu_custom_call.1} parent=39 // pred_region
          %312 = vsyncadd %s304, 0
          %s313 = smul.addr %s23, 8
          %s314 = scalar_lea.hbm %s5, %s313
          %s316 = sshll.u32 %s307, 4
          %s317 = int_to_ptr.vmem [resolvable:$true] %s316
          %s318 = sshll.u32 %s314, 4
          %s319 = int_to_ptr.hbm [resolvable:$true] %s318
          %321 = dma.vmem_to_hbm [thread:$0]  %s317, 128, %s319, %s304
        $region52: #{tpu_custom_call.1} parent=39 // pred_fallthru
          _
      $region40: #{tpu_custom_call.1} parent=5 // pred_fallthru
        _
      %p322 = scmp.le.s32.totalorder 2, %s18
      // Predicated region
      $region53: #{tpu_custom_call.1} parent=5 // pred_check
        %p323 = pneg %p322
      $region54: #{tpu_custom_call.1} parent=5 // pred_check_branch
        %325 = sbr.rel (%p323) target = $region56
      $region55: #{tpu_custom_call.1} parent=5 // pred_region
        %s326 = ssub.s32 %s18, 2
        // Predicated region
        $region57: #{tpu_custom_call.1} parent=55 // pred_check
          %p327 = pneg %p157
        $region58: #{tpu_custom_call.1} parent=55 // pred_check_branch
          %329 = sbr.rel (%p327) target = $region60
        $region59: #{tpu_custom_call.1} parent=55 // pred_region
          %s330 = sand.u32 %s142, 1
          %s331 = scalar_lea.sflag [#allocation4], %s330
          %s332 = sand.u32 %s142, 1
          %s333 = smul.addr %s332, 8
          %s334 = scalar_lea.vmem [#allocation7], %s333
          %336 = dma.done %s331, 128
        $region60: #{tpu_custom_call.1} parent=55 // pred_fallthru
          _
      $region56: #{tpu_custom_call.1} parent=5 // pred_fallthru
        _
    $region6: #{tpu_custom_call.1} parent=1 // loop_footer
      %s22 = sadd.s32 1, %s18
    $region7: #{tpu_custom_call.1} parent=1 // loop_footer_branch
      %17 = sbr.rel target = $region3
    $region8: #{tpu_custom_call.1} parent=1 // loop_exit
      _
    %337 = vsyncpa [#allocation3], 1
    %s338 = scalar_lea.sflag [#allocation3], 1
    %339 = vsyncpa %s338, 1
    %340 = vsyncpa [#allocation6], 1
    %341 = vsyncpa [#allocation4], 1
    %s342 = scalar_lea.sflag [#allocation4], 1
    %343 = vsyncpa %s342, 1

</llo_original>
